<compile_context>
chip_gen: v7x
topology: tpu7x:2x2x1
jax: 0.10.0
libtpu: 0.0.40
codegen_flags: <defaults>
</compile_context>

<pallas_src>
import jax
import jax.numpy as jnp
from jax.experimental import pallas as pl
from jax.experimental.pallas import tpu as pltpu

_MAX_BLOCK_ROWS = 8192          # upper bound on rows per grid step
_VMEM_BLOCK_BUDGET = 24 << 20   # bytes of VMEM reserved for the pipelined blocks
_LANES = 128                    # vreg lane width (last-dim padding granularity)


def _round_up(n, m):
    return ((n + m - 1) // m) * m


def _choose_block_rows(batch, num_features, itemsize):
    """Pick rows-per-tile from a padding-aware VMEM budget (double-buffered)."""
    f_pad = _round_up(num_features, _LANES)          # x block is lane-padded in VMEM
    per_row = 2 * f_pad * itemsize                   # x block, double-buffered
    per_row += 2 * _LANES * 4                        # (tm, 1) f32 out block, lane-padded, x2
    rows = _VMEM_BLOCK_BUDGET // per_row
    rows = min(rows, _MAX_BLOCK_ROWS, _round_up(batch, 8))
    return max(8, (rows // 8) * 8)


def _logreg_kernel(x_ref, w_ref, b_ref, o_ref):
    # x_ref: (tm, F) VMEM   w_ref: (F, 1) VMEM (resident across the grid)
    # b_ref: (1,)  SMEM     o_ref: (tm, 1) VMEM
    x = x_ref[...]
    w = w_ref[...]
    # Contraction on the MXU with f32 accumulation; keeps the VPU/XLU free so
    # the kernel stays HBM-streaming-bound.
    z = jnp.dot(x, w, preferred_element_type=jnp.float32)        # (tm, 1)
    z = z + b_ref[0]                                             # scalar bias from SMEM
    # Exact, numerically stable sigmoid: exp on the EUP, one divide.
    e = jnp.exp(-jnp.abs(z))
    r = 1.0 / (1.0 + e)
    o_ref[...] = jnp.where(z >= 0, r, e * r).astype(o_ref.dtype)


def logistic_regression_forward(x, weight, bias, *, block_rows=None, input_dtype=None):
    """sigmoid(x @ weight.T + bias).

    x: (B, F) ; weight: (1, F) ; bias: (1,)  ->  (B, 1) float32.

    input_dtype=jnp.bfloat16 halves x HBM traffic on v6e/v7x (MXU accumulates
    in f32 either way); default f32 matches the PyTorch reference bit-for-bit
    up to summation order.
    """
    B, F = x.shape
    if input_dtype is not None:
        x = x.astype(input_dtype)
    weight = weight.astype(x.dtype)
    itemsize = jnp.dtype(x.dtype).itemsize

    tm = _choose_block_rows(B, F, itemsize) if block_rows is None else block_rows
    tm = max(8, (tm // 8) * 8)

    w_col = weight.reshape(1, F).T                   # (F, 1): MXU rhs, stays resident
    b1 = bias.reshape(1).astype(jnp.float32)         # single SMEM scalar

    grid = (pl.cdiv(B, tm),)                         # ragged tail handled by Pallas masking

    # Explicit VMEM limit derived from padding-aware accounting (not real bytes):
    # both the x block and the (tm, 1) output block are lane-padded to 128.
    f_pad = _round_up(F, _LANES)
    vmem_needed = 2 * tm * f_pad * itemsize          # x, double-buffered
    vmem_needed += 2 * tm * _LANES * 4               # out, double-buffered
    vmem_needed += _round_up(F, 8) * _LANES * itemsize  # resident weight tile
    vmem_limit = int(min(max(vmem_needed + (2 << 20), 16 << 20), 48 << 20))

    cost = pl.CostEstimate(
        flops=2 * B * F,
        transcendentals=B,
        bytes_accessed=B * F * itemsize + B * 4 + F * itemsize + 4,
    )

    out = pl.pallas_call(
        _logreg_kernel,
        out_shape=jax.ShapeDtypeStruct((B, 1), jnp.float32),
        grid_spec=pltpu.PrefetchScalarGridSpec(
            num_scalar_prefetch=0,
            grid=grid,
            in_specs=[
                # x tile marches down the batch; double-buffered by Pallas.
                pl.BlockSpec((tm, F), lambda i: (i, 0)),
                # weight column stays resident (same block every grid step).
                pl.BlockSpec((F, 1), lambda i: (0, 0)),
                # bias: one scalar in SMEM.
                pl.BlockSpec(memory_space=pltpu.MemorySpace.SMEM),
            ],
            out_specs=pl.BlockSpec((tm, 1), lambda i: (i, 0)),
        ),
        compiler_params=pltpu.CompilerParams(
            # Batch tiles are independent -> shardable across both TCs on v7x
            # (grid length >= 2 whenever B > tm).
            dimension_semantics=("parallel",),
            vmem_limit_bytes=vmem_limit,
        ),
        cost_estimate=cost,
    )(x, w_col, b1)

    return out


if __name__ == "__main__":
    key = jax.random.PRNGKey(0)
    k_x, k_w, k_b = jax.random.split(key, 3)

    batch = 8
    num_features = 32

    # nn.Linear-style init: U(-1/sqrt(F), 1/sqrt(F))
    bound = 1.0 / jnp.sqrt(jnp.float32(num_features))
    weight = jax.random.uniform(k_w, (1, num_features), jnp.float32, -bound, bound)
    bias = jax.random.uniform(k_b, (1,), jnp.float32, -bound, bound)

    x = jax.random.normal(k_x, (batch, num_features), jnp.float32)

    out = logistic_regression_forward(x, weight, bias)
    out = jax.block_until_ready(out)

    # Reference check in plain JAX (exact sigmoid in-kernel -> tight tolerance).
    ref = jax.nn.sigmoid(x @ weight.T + bias)
    assert out.shape == (batch, 1)
    assert jnp.allclose(out, ref, atol=1e-5, rtol=1e-5), float(
        jnp.max(jnp.abs(out - ref)))

    print("KERNEL_OK")
</pallas_src>

<mosaic_0001>
module attributes {stable_mosaic.version = 11 : i64} {
  func.func @_logreg_kernel(%arg0: i32, %arg1: memref<8x32xf32, #tpu.memory_space<vmem>>, %arg2: memref<32x1xf32, #tpu.memory_space<vmem>>, %arg3: memref<1xf32, #tpu.memory_space<smem>>, %arg4: memref<8x1xf32, #tpu.memory_space<vmem>>) attributes {dimension_semantics = [#tpu.dimension_semantics<parallel>], iteration_bounds = array<i64: 1>, scalar_prefetch = 0 : i64, scratch_operands = 0 : i64, tpu.core_type = #tpu.core_type<tc>, window_params = [{transform_indices = @transform_0, window_bounds = array<i64: 8, 32>}, {pipeline_mode = #tpu.pipeline_mode<synchronous>, transform_indices = @transform_1, window_bounds = array<i64: 32, 1>}, {transform_indices = @transform_2, window_bounds = array<i64: 1>}, {transform_indices = @transform_3, window_bounds = array<i64: 8, 1>}]} {
    %c0 = arith.constant 0 : index
    %c0_0 = arith.constant 0 : index
    %0 = vector.load %arg1[%c0, %c0_0] : memref<8x32xf32, #tpu.memory_space<vmem>>, vector<8x32xf32>
    %c0_1 = arith.constant 0 : index
    %c0_2 = arith.constant 0 : index
    %1 = vector.load %arg2[%c0_1, %c0_2] : memref<32x1xf32, #tpu.memory_space<vmem>>, vector<32x1xf32>
    %cst = arith.constant dense<0.000000e+00> : vector<8x1xf32>
    %2 = tpu.matmul %0, %1, %cst {dimension_numbers = #tpu.dot_dimension_numbers<[1], [0], [0], [1], [0, 0, 1, 1], [], []>} : vector<8x32xf32>, vector<32x1xf32>, vector<8x1xf32> -> vector<8x1xf32>
    %c0_3 = arith.constant 0 : index
    %3 = memref.load %arg3[%c0_3] : memref<1xf32, #tpu.memory_space<smem>>
    %4 = vector.broadcast %3 : f32 to vector<8x1xf32>
    %5 = arith.addf %2, %4 : vector<8x1xf32>
    %6 = math.absf %5 : vector<8x1xf32>
    %cst_4 = arith.constant 0.000000e+00 : f32
    %7 = vector.broadcast %cst_4 : f32 to vector<8x1xf32>
    %8 = arith.subf %7, %6 : vector<8x1xf32>
    %9 = math.exp %8 : vector<8x1xf32>
    %cst_5 = arith.constant 1.000000e+00 : f32
    %10 = vector.broadcast %cst_5 : f32 to vector<8x1xf32>
    %11 = arith.addf %10, %9 : vector<8x1xf32>
    %cst_6 = arith.constant 1.000000e+00 : f32
    %12 = vector.broadcast %cst_6 : f32 to vector<8x1xf32>
    %13 = arith.divf %12, %11 : vector<8x1xf32>
    %cst_7 = arith.constant 0.000000e+00 : f32
    %14 = vector.broadcast %cst_7 : f32 to vector<8x1xf32>
    %15 = arith.cmpf oge, %5, %14 : vector<8x1xf32>
    %16 = arith.mulf %9, %13 : vector<8x1xf32>
    %17 = arith.select %15, %13, %16 : vector<8x1xi1>, vector<8x1xf32>
    %c0_8 = arith.constant 0 : index
    %c0_9 = arith.constant 0 : index
    %18 = vector.load %arg4[%c0_8, %c0_9] : memref<8x1xf32, #tpu.memory_space<vmem>>, vector<8x1xf32>
    tpu.vector_store %arg4[%c0_8, %c0_9], %17 {strides = array<i32>} : memref<8x1xf32, #tpu.memory_space<vmem>>, vector<8x1xf32>,
    return
  }
  func.func @transform_0(%arg0: i32) -> (i32, i32) {
    %c0_i32 = arith.constant 0 : i32
    %c0_i32_0 = arith.constant 0 : i32
    return %arg0, %c0_i32 : i32, i32
  }
  func.func @transform_1(%arg0: i32) -> (i32, i32) {
    %c0_i32 = arith.constant 0 : i32
    %c0_i32_0 = arith.constant 0 : i32
    %c0_i32_1 = arith.constant 0 : i32
    return %c0_i32, %c0_i32_0 : i32, i32
  }
  func.func @transform_2(%arg0: i32) -> i32 {
    %c0_i32 = arith.constant 0 : i32
    %c0_i32_0 = arith.constant 0 : i32
    return %c0_i32 : i32
  }
  func.func @transform_3(%arg0: i32) -> (i32, i32) {
    %c0_i32 = arith.constant 0 : i32
    %c0_i32_0 = arith.constant 0 : i32
    return %arg0, %c0_i32 : i32, i32
  }
}

</mosaic_0001>

<llo_original>
// kernel: tpu_custom_call.1
$region0: #{tpu_custom_call.1}
  #allocation0 [shape = 'u32[]', space=smem, size = 0x4, offset = 0x4, fixed_abs, tag = 'smem constant byte address 0x4 - core index']
  #allocation1 [shape = 'u32[144,128]{1,0:T(1,128)}', space=vmem, size = 0x12000, scoped, tag = 'internal scratch']
  #allocation2 [shape = 'f32[1]{0:T(128)S(6)}', space=smem, size = 0x200, scoped, tag = 'scoped memory for tpu_custom_call.1']
  %s0 = inlined_call_operand.vmem [shape: f32[8,32], index: 0, kind: input, shape index: {}]
  %s1 = inlined_call_operand.vmem [shape: f32[32,1], index: 1, kind: input, shape index: {}]
  %s2 = inlined_call_operand.<no memory space> [shape: f32[1], index: 2, kind: input, shape index: {}]
  %s3 = inlined_call_operand.vmem [shape: f32[8,1], index: 3, kind: output, shape index: {}]
  %s4 = sld [smem:[#allocation0]]
  $region22: #{tpu_custom_call.1} parent=0
    _
  %s6 = ssub.s32 1, %s4
  %s7 = scalar_select 0, %s6, %s4
  %8 = sst [smem:[#allocation2]] %s2
  // Predicated region
  $region2: #{tpu_custom_call.1} parent=0 // pred_check
    _
  $region3: #{tpu_custom_call.1} parent=0 // pred_check_branch
    %10 = sbr.rel (0) target = $region5
  $region4: #{tpu_custom_call.1} parent=0 // pred_region
    _
  $region5: #{tpu_custom_call.1} parent=0 // pred_fallthru
    _
  // Predicated region
  $region6: #{tpu_custom_call.1} parent=0 // pred_check
    _
  $region7: #{tpu_custom_call.1} parent=0 // pred_check_branch
    %12 = sbr.rel (0) target = $region9
  $region8: #{tpu_custom_call.1} parent=0 // pred_region
    _
  $region9: #{tpu_custom_call.1} parent=0 // pred_fallthru
    _
  // Predicated region
  $region10: #{tpu_custom_call.1} parent=0 // pred_check
    _
  $region11: #{tpu_custom_call.1} parent=0 // pred_check_branch
    %14 = sbr.rel (0) target = $region13
  $region12: #{tpu_custom_call.1} parent=0 // pred_region
    _
  $region13: #{tpu_custom_call.1} parent=0 // pred_fallthru
    _
  %v15 = vld [vmem:[%s0] sm:$0xff]
  %v16 = vld [vmem:[%s1] sm:$0xff]
  %v17 = vld [vmem:[%s1 + $0x8] sm:$0xff]
  %v18 = vld [vmem:[%s1 + $0x10] sm:$0xff]
  %v19 = vld [vmem:[%s1 + $0x18] sm:$0xff]
  %s20 = sld [smem:[#allocation2]]
  %v21 = vstv %s20
  %vm22 = vcmask 261120
  %v24 = vsel %vm22, %v15, 0
  %26 = vmatprep.subr.mxu0 0.0
  %27 = vmatpush1.msra.mxu0 %v16
  %28 = vmatprep.subr.mxu0 0.0
  %29 = vmatpush1.msra.mxu0 %v17
  %30 = vmatprep.subr.mxu0 0.0
  %31 = vmatpush1.msra.mxu0 %v18
  %32 = vmatprep.subr.mxu0 0.0
  %33 = vmatpush1.msra.mxu0 %v19
  %34 = vmatprep.subr.mxu0 0.0
  %35 = vmatpush1.msra.mxu0 0.0
  %36 = vmatprep.subr.mxu0 0.0
  %37 = vmatpush1.msra.mxu0 0.0
  %38 = vmatprep.subr.mxu0 0.0
  %39 = vmatpush1.msra.mxu0 0.0
  %40 = vmatprep.subr.mxu0 0.0
  %41 = vmatpush1.msra.mxu0 0.0
  %42 = vmatprep.subr.mxu0 0.0
  %43 = vmatpush1.msra.mxu0 0.0
  %44 = vmatprep.subr.mxu0 0.0
  %45 = vmatpush1.msra.mxu0 0.0
  %46 = vmatprep.subr.mxu0 0.0
  %47 = vmatpush1.msra.mxu0 0.0
  %48 = vmatprep.subr.mxu0 0.0
  %49 = vmatpush1.msra.mxu0 0.0
  %50 = vmatprep.subr.mxu0 0.0
  %51 = vmatpush1.msra.mxu0 0.0
  %52 = vmatprep.subr.mxu0 0.0
  %53 = vmatpush1.msra.mxu0 0.0
  %54 = vmatprep.subr.mxu0 0.0
  %55 = vmatpush1.msra.mxu0 0.0
  %56 = vmatprep.subr.mxu0 0.0
  %57 = vmatpush1.msra.mxu0 0.0
  %58 = vmatprep.subr.mxu0 0.0
  %59 = vmatpush1.msra.mxu0 0.0
  %60 = vmatprep.subr.mxu0 0.0
  %61 = vmatpush1.msra.mxu0 0.0
  %62 = vmatprep.subr.mxu0 0.0
  %63 = vmatpush1.msra.mxu0 0.0
  %64 = vmatprep.subr.mxu0 0.0
  %65 = vmatpush1.msra.mxu0 0.0
  %66 = vmatprep.subr.mxu0 0.0
  %67 = vmatpush1.msra.mxu0 0.0
  %68 = vmatprep.subr.mxu0 0.0
  %69 = vmatpush1.msra.mxu0 0.0
  %70 = vmatprep.subr.mxu0 0.0
  %71 = vmatpush1.msra.mxu0 0.0
  %72 = vmatprep.subr.mxu0 0.0
  %73 = vmatpush1.msra.mxu0 0.0
  %74 = vmatprep.subr.mxu0 0.0
  %75 = vmatpush1.msra.mxu0 0.0
  %76 = vmatprep.subr.mxu0 0.0
  %77 = vmatpush1.msra.mxu0 0.0
  %78 = vmatprep.subr.mxu0 0.0
  %79 = vmatpush1.msra.mxu0 0.0
  %80 = vmatprep.subr.mxu0 0.0
  %81 = vmatpush1.msra.mxu0 0.0
  %82 = vmatprep.subr.mxu0 0.0
  %83 = vmatpush1.msra.mxu0 0.0
  %84 = vmatprep.subr.mxu0 0.0
  %85 = vmatpush1.msra.mxu0 0.0
  %86 = vmatprep.subr.mxu0 0.0
  %87 = vmatpush1.msra.mxu0 0.0
  %88 = vmatprep.subr.mxu0 0.0
  %89 = vmatpush1.msra.mxu0 0.0
  %90 = vmatprep.mubr.f32.mxu0 0.0
  %91 = vmatmul.mubr.f32.gmra.mrb[0].mxu0 %v24
  %v92 = vpop.f32.mrb[0].mxu0
  %v93 = vadd.f32 %v21, %v92
  %v94 = vpop.f32.mrb[0].mxu0
  %95 = vdwg.mxu0
  %v96 = vand.u32 2147483647, %v93
  %v97 = vsub.f32 0.0, %v96
  %v98 = vmul.f32 %v97, 1.442695
  %v99 = vpow.pop %v98
  %v100 = vadd.f32 %v99, 1.0
  %v101 = vrcp.pop %v100
  %v102 = vmul.f32 1.0, %v101
  %vm103 = vcmp.ge.f32.partialorder %v93, 0.0
  %v104 = vmul.f32 %v99, %v102
  %v105 = vsel %vm103, %v102, %v104
  %vm106 = vcmask 7168
  %107 = vst.msk [vmem:[%s3] sm:$0xff] %vm106, %v105
  // Predicated region
  $region14: #{tpu_custom_call.1} parent=0 // pred_check
    _
  $region15: #{tpu_custom_call.1} parent=0 // pred_check_branch
    %109 = sbr.rel (0) target = $region17
  $region16: #{tpu_custom_call.1} parent=0 // pred_region
    _
  $region17: #{tpu_custom_call.1} parent=0 // pred_fallthru
    _
  // Predicated region
  $region18: #{tpu_custom_call.1} parent=0 // pred_check
    _
  $region19: #{tpu_custom_call.1} parent=0 // pred_check_branch
    %111 = sbr.rel (0) target = $region21
  $region20: #{tpu_custom_call.1} parent=0 // pred_region
    _
  $region21: #{tpu_custom_call.1} parent=0 // pred_fallthru
    _

</llo_original>
